<compile_context>
chip_gen: v6e
topology: v6e:2x2x1
jax: 0.10.0
libtpu: 0.0.40
codegen_flags: <defaults>
</compile_context>

<pallas_src>
import math

import jax
import jax.numpy as jnp
from jax import lax
from jax.experimental import pallas as pl
from jax.experimental.pallas import tpu as pltpu

_LOG_STD_MIN = math.log(1e-6)


def _round_up(v, m):
    return ((v + m - 1) // m) * m


def _actor_mlp_kernel(x_ref, w1_ref, b1_ref, w2_ref, b2_ref, w3_ref, b3_ref,
                      mean_ref):
    # x_ref: (b_blk, in_size).  Weights keep torch (out_features, in_features)
    # layout; contracting dim 1 of both operands == x @ W^T with no transposes.
    dn = (((1,), (1,)), ((), ()))
    x = x_ref[...]
    h1 = jnp.maximum(
        lax.dot_general(x, w1_ref[...], dn, preferred_element_type=jnp.float32)
        + b1_ref[...], 0.0)                                  # (b_blk, h)
    h2 = jnp.maximum(
        lax.dot_general(h1, w2_ref[...], dn, preferred_element_type=jnp.float32)
        + b2_ref[...], 0.0)                                  # (b_blk, h)
    mean_ref[...] = (
        lax.dot_general(h2, w3_ref[...], dn, preferred_element_type=jnp.float32)
        + b3_ref[...]).astype(mean_ref.dtype)                # (b_blk, out)


def _choose_b_blk(B):
    """Tile the batch axis: even >=2 blocks for v7x megacore when B allows,
    a single block for small B (serial grid on v5e/v6e)."""
    if B >= 256:
        n_blk = max(2, pl.cdiv(B, 1024))
        if n_blk % 2:
            n_blk += 1
        return _round_up(pl.cdiv(B, n_blk), 8)
    return _round_up(max(B, 8), 8)


def actor_forward(x, params, *, b_blk=None):
    """x: (B, in_size) f32. params in PyTorch layout.

    Returns (mean (B, out_size), std (1, out_size))."""
    w1, b1 = params["w1"], params["b1"]
    w2, b2 = params["w2"], params["b2"]
    w3, b3 = params["w3"], params["b3"]
    log_std = params["log_std"]

    B, in_size = x.shape
    h = w1.shape[0]
    out_size = w3.shape[0]

    if b_blk is None:
        b_blk = _choose_b_blk(B)
    n_blk = pl.cdiv(B, b_blk)
    B_pad = n_blk * b_blk

    x = x.astype(jnp.float32)
    if B_pad != B:
        x = jnp.pad(x, ((0, B_pad - B), (0, 0)))

    b1r = b1.astype(jnp.float32).reshape(1, h)
    b2r = b2.astype(jnp.float32).reshape(1, h)
    b3r = b3.astype(jnp.float32).reshape(1, out_size)

    mean_full = pl.pallas_call(
        _actor_mlp_kernel,
        out_shape=jax.ShapeDtypeStruct((B_pad, out_size), jnp.float32),
        grid=(n_blk,),
        in_specs=[
            pl.BlockSpec((b_blk, in_size), lambda i: (i, 0)),   # x tile (streamed)
            pl.BlockSpec((h, in_size), lambda i: (0, 0)),       # w1 (resident)
            pl.BlockSpec((1, h), lambda i: (0, 0)),             # b1
            pl.BlockSpec((h, h), lambda i: (0, 0)),             # w2
            pl.BlockSpec((1, h), lambda i: (0, 0)),             # b2
            pl.BlockSpec((out_size, h), lambda i: (0, 0)),      # w3
            pl.BlockSpec((1, out_size), lambda i: (0, 0)),      # b3
        ],
        out_specs=pl.BlockSpec((b_blk, out_size), lambda i: (i, 0)),
        compiler_params=pltpu.CompilerParams(
            dimension_semantics=("parallel",),
            vmem_limit_bytes=32 * 1024 * 1024,
        ),
    )(x, w1.astype(jnp.float32), b1r, w2.astype(jnp.float32), b2r,
      w3.astype(jnp.float32), b3r)

    mean = mean_full if B_pad == B else mean_full[:B]

    # std is 8 x-independent elements: plain JAX, no extra kernel launch.
    std = jnp.exp(jnp.maximum(log_std.astype(jnp.float32), _LOG_STD_MIN))

    # TODO(synk): torch.distributions Independent(Normal(mean, std), 1) object
    # construction has no Pallas equivalent; we return its parameters instead.
    return mean, std


def reference_forward(x, params):
    """Pure-JAX replica of the PyTorch Actor.forward for verification."""
    h1 = jax.nn.relu(x @ params["w1"].T + params["b1"])
    h2 = jax.nn.relu(h1 @ params["w2"].T + params["b2"])
    mean = h2 @ params["w3"].T + params["b3"]
    std = jnp.exp(jnp.maximum(params["log_std"], _LOG_STD_MIN))
    return mean, std


if __name__ == "__main__":
    B, in_size, h, out_size = 256, 32, 64, 8   # grid of 2 batch tiles of 128

    key = jax.random.PRNGKey(0)
    k_x, k1, kb1, k2, kb2, k3, kb3 = jax.random.split(key, 7)

    params = {
        "w1": 0.1 * jax.random.normal(k1, (h, in_size), dtype=jnp.float32),
        "b1": 0.1 * jax.random.normal(kb1, (h,), dtype=jnp.float32),
        "w2": 0.1 * jax.random.normal(k2, (h, h), dtype=jnp.float32),
        "b2": 0.1 * jax.random.normal(kb2, (h,), dtype=jnp.float32),
        "w3": 0.1 * jax.random.normal(k3, (out_size, h), dtype=jnp.float32),
        "b3": 0.1 * jax.random.normal(kb3, (out_size,), dtype=jnp.float32),
        # torch init: log_std = log(1.0) * ones(1, out_size) == zeros
        "log_std": jnp.zeros((1, out_size), dtype=jnp.float32),
    }
    x = jax.random.normal(k_x, (B, in_size), dtype=jnp.float32)

    mean, std = actor_forward(x, params)
    mean = jax.block_until_ready(mean)
    std = jax.block_until_ready(std)

    mean_ref, std_ref = reference_forward(x, params)
    assert mean.shape == (B, out_size) and std.shape == (1, out_size)
    assert jnp.allclose(mean, mean_ref, atol=1e-4, rtol=1e-4), (
        f"max abs err mean = {jnp.max(jnp.abs(mean - mean_ref))}")
    assert jnp.allclose(std, std_ref, atol=1e-6, rtol=1e-6), (
        f"max abs err std = {jnp.max(jnp.abs(std - std_ref))}")
    print("KERNEL_OK")
</pallas_src>

<mosaic_0001>
module attributes {stable_mosaic.version = 11 : i64} {
  func.func @_actor_mlp_kernel(%arg0: i32, %arg1: memref<128x32xf32, #tpu.memory_space<vmem>>, %arg2: memref<64x32xf32, #tpu.memory_space<vmem>>, %arg3: memref<1x64xf32, #tpu.memory_space<vmem>>, %arg4: memref<64x64xf32, #tpu.memory_space<vmem>>, %arg5: memref<1x64xf32, #tpu.memory_space<vmem>>, %arg6: memref<8x64xf32, #tpu.memory_space<vmem>>, %arg7: memref<1x8xf32, #tpu.memory_space<vmem>>, %arg8: memref<128x8xf32, #tpu.memory_space<vmem>>) attributes {dimension_semantics = [#tpu.dimension_semantics<parallel>], iteration_bounds = array<i64: 2>, scalar_prefetch = 0 : i64, scratch_operands = 0 : i64, tpu.core_type = #tpu.core_type<tc>, window_params = [{transform_indices = @transform_0, window_bounds = array<i64: 128, 32>}, {pipeline_mode = #tpu.pipeline_mode<synchronous>, transform_indices = @transform_1, window_bounds = array<i64: 64, 32>}, {pipeline_mode = #tpu.pipeline_mode<synchronous>, transform_indices = @transform_2, window_bounds = array<i64: 1, 64>}, {pipeline_mode = #tpu.pipeline_mode<synchronous>, transform_indices = @transform_3, window_bounds = array<i64: 64, 64>}, {pipeline_mode = #tpu.pipeline_mode<synchronous>, transform_indices = @transform_4, window_bounds = array<i64: 1, 64>}, {pipeline_mode = #tpu.pipeline_mode<synchronous>, transform_indices = @transform_5, window_bounds = array<i64: 8, 64>}, {pipeline_mode = #tpu.pipeline_mode<synchronous>, transform_indices = @transform_6, window_bounds = array<i64: 1, 8>}, {transform_indices = @transform_7, window_bounds = array<i64: 128, 8>}]} {
    %c0 = arith.constant 0 : index
    %c0_0 = arith.constant 0 : index
    %0 = vector.load %arg1[%c0, %c0_0] : memref<128x32xf32, #tpu.memory_space<vmem>>, vector<128x32xf32>
    %c0_1 = arith.constant 0 : index
    %c0_2 = arith.constant 0 : index
    %1 = vector.load %arg2[%c0_1, %c0_2] : memref<64x32xf32, #tpu.memory_space<vmem>>, vector<64x32xf32>
    %cst = arith.constant dense<0.000000e+00> : vector<128x64xf32>
    %2 = tpu.matmul %0, %1, %cst {dimension_numbers = #tpu.dot_dimension_numbers<[1], [1], [0], [0], [0, 0, 1, 0], [], []>} : vector<128x32xf32>, vector<64x32xf32>, vector<128x64xf32> -> vector<128x64xf32>
    %c0_3 = arith.constant 0 : index
    %c0_4 = arith.constant 0 : index
    %3 = vector.load %arg3[%c0_3, %c0_4] : memref<1x64xf32, #tpu.memory_space<vmem>>, vector<1x64xf32>
    %4 = vector.broadcast %3 : vector<1x64xf32> to vector<128x64xf32>
    %5 = arith.addf %2, %4 : vector<128x64xf32>
    %cst_5 = arith.constant 0.000000e+00 : f32
    %6 = vector.broadcast %cst_5 : f32 to vector<128x64xf32>
    %7 = arith.maximumf %5, %6 : vector<128x64xf32>
    %c0_6 = arith.constant 0 : index
    %c0_7 = arith.constant 0 : index
    %8 = vector.load %arg4[%c0_6, %c0_7] : memref<64x64xf32, #tpu.memory_space<vmem>>, vector<64x64xf32>
    %cst_8 = arith.constant dense<0.000000e+00> : vector<128x64xf32>
    %9 = tpu.matmul %7, %8, %cst_8 {dimension_numbers = #tpu.dot_dimension_numbers<[1], [1], [0], [0], [0, 0, 1, 0], [], []>} : vector<128x64xf32>, vector<64x64xf32>, vector<128x64xf32> -> vector<128x64xf32>
    %c0_9 = arith.constant 0 : index
    %c0_10 = arith.constant 0 : index
    %10 = vector.load %arg5[%c0_9, %c0_10] : memref<1x64xf32, #tpu.memory_space<vmem>>, vector<1x64xf32>
    %11 = vector.broadcast %10 : vector<1x64xf32> to vector<128x64xf32>
    %12 = arith.addf %9, %11 : vector<128x64xf32>
    %cst_11 = arith.constant 0.000000e+00 : f32
    %13 = vector.broadcast %cst_11 : f32 to vector<128x64xf32>
    %14 = arith.maximumf %12, %13 : vector<128x64xf32>
    %c0_12 = arith.constant 0 : index
    %c0_13 = arith.constant 0 : index
    %15 = vector.load %arg6[%c0_12, %c0_13] : memref<8x64xf32, #tpu.memory_space<vmem>>, vector<8x64xf32>
    %cst_14 = arith.constant dense<0.000000e+00> : vector<128x8xf32>
    %16 = tpu.matmul %14, %15, %cst_14 {dimension_numbers = #tpu.dot_dimension_numbers<[1], [1], [0], [0], [0, 0, 1, 0], [], []>} : vector<128x64xf32>, vector<8x64xf32>, vector<128x8xf32> -> vector<128x8xf32>
    %c0_15 = arith.constant 0 : index
    %c0_16 = arith.constant 0 : index
    %17 = vector.load %arg7[%c0_15, %c0_16] : memref<1x8xf32, #tpu.memory_space<vmem>>, vector<1x8xf32>
    %18 = vector.broadcast %17 : vector<1x8xf32> to vector<128x8xf32>
    %19 = arith.addf %16, %18 : vector<128x8xf32>
    %c0_17 = arith.constant 0 : index
    %c0_18 = arith.constant 0 : index
    %20 = vector.load %arg8[%c0_17, %c0_18] : memref<128x8xf32, #tpu.memory_space<vmem>>, vector<128x8xf32>
    tpu.vector_store %arg8[%c0_17, %c0_18], %19 {strides = array<i32>} : memref<128x8xf32, #tpu.memory_space<vmem>>, vector<128x8xf32>,
    return
  }
  func.func @transform_0(%arg0: i32) -> (i32, i32) {
    %c0_i32 = arith.constant 0 : i32
    %c0_i32_0 = arith.constant 0 : i32
    return %arg0, %c0_i32 : i32, i32
  }
  func.func @transform_1(%arg0: i32) -> (i32, i32) {
    %c0_i32 = arith.constant 0 : i32
    %c0_i32_0 = arith.constant 0 : i32
    %c0_i32_1 = arith.constant 0 : i32
    return %c0_i32, %c0_i32_0 : i32, i32
  }
  func.func @transform_2(%arg0: i32) -> (i32, i32) {
    %c0_i32 = arith.constant 0 : i32
    %c0_i32_0 = arith.constant 0 : i32
    %c0_i32_1 = arith.constant 0 : i32
    return %c0_i32, %c0_i32_0 : i32, i32
  }
  func.func @transform_3(%arg0: i32) -> (i32, i32) {
    %c0_i32 = arith.constant 0 : i32
    %c0_i32_0 = arith.constant 0 : i32
    %c0_i32_1 = arith.constant 0 : i32
    return %c0_i32, %c0_i32_0 : i32, i32
  }
  func.func @transform_4(%arg0: i32) -> (i32, i32) {
    %c0_i32 = arith.constant 0 : i32
    %c0_i32_0 = arith.constant 0 : i32
    %c0_i32_1 = arith.constant 0 : i32
    return %c0_i32, %c0_i32_0 : i32, i32
  }
  func.func @transform_5(%arg0: i32) -> (i32, i32) {
    %c0_i32 = arith.constant 0 : i32
    %c0_i32_0 = arith.constant 0 : i32
    %c0_i32_1 = arith.constant 0 : i32
    return %c0_i32, %c0_i32_0 : i32, i32
  }
  func.func @transform_6(%arg0: i32) -> (i32, i32) {
    %c0_i32 = arith.constant 0 : i32
    %c0_i32_0 = arith.constant 0 : i32
    %c0_i32_1 = arith.constant 0 : i32
    return %c0_i32, %c0_i32_0 : i32, i32
  }
  func.func @transform_7(%arg0: i32) -> (i32, i32) {
    %c0_i32 = arith.constant 0 : i32
    %c0_i32_0 = arith.constant 0 : i32
    return %arg0, %c0_i32 : i32, i32
  }
}

</mosaic_0001>

<llo_original>
// kernel: tpu_custom_call.1
$region0: #{tpu_custom_call.1}
  #allocation0 [shape = 'u32[]', space=smem, size = 0x4, offset = 0x4, fixed_abs, tag = 'smem constant byte address 0x4 - core index']
  #allocation1 [shape = 'u32[144,128]{1,0:T(1,128)}', space=vmem, size = 0x12000, scoped, tag = 'internal scratch']
  %s0 = inlined_call_operand.vmem [shape: f32[256,32], index: 0, kind: input, shape index: {}]
  %s1 = inlined_call_operand.vmem [shape: f32[64,32], index: 1, kind: input, shape index: {}]
  %s2 = inlined_call_operand.vmem [shape: f32[1,64], index: 2, kind: input, shape index: {}]
  %s3 = inlined_call_operand.vmem [shape: f32[64,64], index: 3, kind: input, shape index: {}]
  %s4 = inlined_call_operand.vmem [shape: f32[1,64], index: 4, kind: input, shape index: {}]
  %s5 = inlined_call_operand.vmem [shape: f32[8,64], index: 5, kind: input, shape index: {}]
  %s6 = inlined_call_operand.vmem [shape: f32[1,8], index: 6, kind: input, shape index: {}]
  %s7 = inlined_call_operand.vmem [shape: f32[256,8], index: 7, kind: output, shape index: {}]
  %s8 = sld [smem:[#allocation0]]
  $region61: #{tpu_custom_call.1} parent=0
    _
  %s10 = ssub.s32 1, %s8
  %s11 = scalar_select 0, %s10, %s8
  loop: start=0, step=1, limit=4
  $region2: #{tpu_custom_call.1} parent=0 // loop_pre_header
    _
  $region3: #{tpu_custom_call.1} parent=0 // loop_header
    %s13 = sphi 0, %s17
    %p14 = scmp.ge.s32.totalorder %s13, 4
    %s23 = sphi 0, %s25
    %s26 = sphi 0, %s23
    %s27 = sphi 0, %s26
    %s43 = sphi 0, %s27
    %s47 = sphi 0, %s47
    %s49 = sphi 0, %s47
    %s50 = sphi 0, %s49
    %s64 = sphi 0, %s50
    %s68 = sphi 0, %s68
    %s70 = sphi 0, %s68
    %s71 = sphi 0, %s70
    %s85 = sphi 0, %s71
    %s89 = sphi 0, %s89
    %s91 = sphi 0, %s89
    %s92 = sphi 0, %s91
    %s106 = sphi 0, %s92
    %s110 = sphi 0, %s110
    %s112 = sphi 0, %s110
    %s113 = sphi 0, %s112
    %s127 = sphi 0, %s113
    %s131 = sphi 0, %s131
    %s133 = sphi 0, %s131
    %s134 = sphi 0, %s133
    %s148 = sphi 0, %s134
    %s152 = sphi 0, %s152
    %s154 = sphi 0, %s152
    %s155 = sphi 0, %s154
    %s169 = sphi 0, %s155
    %s175 = sphi 0, %s177
    %s178 = sphi 0, %s175
    %s179 = sphi 0, %s178
    %s195 = sphi 0, %s179
  $region4: #{tpu_custom_call.1} parent=0 // loop_header_branch
    %16 = sbr.rel (%p14) target = $region8
  $region5: #{tpu_custom_call.1} parent=0 // loop_body
    %s18 = ssub.s32 %s13, 1
    %s19 = ssub.s32 %s13, 2
    %s20 = sadd.s32 %s13, 1
    %s21 = ssub.s32 %s13, %s20
    %p22 = scmp.eq.s32.totalorder %s21, 0
    %s24 = sadd.s32 %s23, 1
    %s25 = scalar_select %p22, %s23, %s24
    %p28 = pneg %p22
    %p29 = scmp.eq.s32.totalorder %s13, 1
    %p30 = por %p28, %p29
    %p31 = scmp.ne.s32.totalorder %s23, %s26
    %p32 = scmp.eq.s32.totalorder %s13, 0
    %p33 = por %p31, %p32
    %p34 = scmp.ne.s32.totalorder %s23, %s26
    %p35 = scmp.eq.s32.totalorder %s18, 1
    %p36 = por %p34, %p35
    %p37 = scmp.ne.s32.totalorder %s26, %s27
    %p38 = scmp.eq.s32.totalorder %s18, 0
    %p39 = por %p37, %p38
    %p40 = scmp.ne.s32.totalorder %s26, %s27
    %p41 = scmp.eq.s32.totalorder %s19, 1
    %p42 = por %p40, %p41
    %p44 = scmp.ne.s32.totalorder %s27, %s43
    %p45 = scmp.eq.s32.totalorder %s19, 0
    %p46 = por %p44, %p45
    %s48 = sadd.s32 %s47, 1
    %p51 = scmp.eq.s32.totalorder %s13, 1
    %p52 = scmp.ne.s32.totalorder %s47, %s49
    %p53 = scmp.eq.s32.totalorder %s13, 0
    %p54 = por %p52, %p53
    %p55 = scmp.ne.s32.totalorder %s47, %s49
    %p56 = scmp.eq.s32.totalorder %s18, 1
    %p57 = por %p55, %p56
    %p58 = scmp.ne.s32.totalorder %s49, %s50
    %p59 = scmp.eq.s32.totalorder %s18, 0
    %p60 = por %p58, %p59
    %p61 = scmp.ne.s32.totalorder %s49, %s50
    %p62 = scmp.eq.s32.totalorder %s19, 1
    %p63 = por %p61, %p62
    %p65 = scmp.ne.s32.totalorder %s50, %s64
    %p66 = scmp.eq.s32.totalorder %s19, 0
    %p67 = por %p65, %p66
    %s69 = sadd.s32 %s68, 1
    %p72 = scmp.eq.s32.totalorder %s13, 1
    %p73 = scmp.ne.s32.totalorder %s68, %s70
    %p74 = scmp.eq.s32.totalorder %s13, 0
    %p75 = por %p73, %p74
    %p76 = scmp.ne.s32.totalorder %s68, %s70
    %p77 = scmp.eq.s32.totalorder %s18, 1
    %p78 = por %p76, %p77
    %p79 = scmp.ne.s32.totalorder %s70, %s71
    %p80 = scmp.eq.s32.totalorder %s18, 0
    %p81 = por %p79, %p80
    %p82 = scmp.ne.s32.totalorder %s70, %s71
    %p83 = scmp.eq.s32.totalorder %s19, 1
    %p84 = por %p82, %p83
    %p86 = scmp.ne.s32.totalorder %s71, %s85
    %p87 = scmp.eq.s32.totalorder %s19, 0
    %p88 = por %p86, %p87
    %s90 = sadd.s32 %s89, 1
    %p93 = scmp.eq.s32.totalorder %s13, 1
    %p94 = scmp.ne.s32.totalorder %s89, %s91
    %p95 = scmp.eq.s32.totalorder %s13, 0
    %p96 = por %p94, %p95
    %p97 = scmp.ne.s32.totalorder %s89, %s91
    %p98 = scmp.eq.s32.totalorder %s18, 1
    %p99 = por %p97, %p98
    %p100 = scmp.ne.s32.totalorder %s91, %s92
    %p101 = scmp.eq.s32.totalorder %s18, 0
    %p102 = por %p100, %p101
    %p103 = scmp.ne.s32.totalorder %s91, %s92
    %p104 = scmp.eq.s32.totalorder %s19, 1
    %p105 = por %p103, %p104
    %p107 = scmp.ne.s32.totalorder %s92, %s106
    %p108 = scmp.eq.s32.totalorder %s19, 0
    %p109 = por %p107, %p108
    %s111 = sadd.s32 %s110, 1
    %p114 = scmp.eq.s32.totalorder %s13, 1
    %p115 = scmp.ne.s32.totalorder %s110, %s112
    %p116 = scmp.eq.s32.totalorder %s13, 0
    %p117 = por %p115, %p116
    %p118 = scmp.ne.s32.totalorder %s110, %s112
    %p119 = scmp.eq.s32.totalorder %s18, 1
    %p120 = por %p118, %p119
    %p121 = scmp.ne.s32.totalorder %s112, %s113
    %p122 = scmp.eq.s32.totalorder %s18, 0
    %p123 = por %p121, %p122
    %p124 = scmp.ne.s32.totalorder %s112, %s113
    %p125 = scmp.eq.s32.totalorder %s19, 1
    %p126 = por %p124, %p125
    %p128 = scmp.ne.s32.totalorder %s113, %s127
    %p129 = scmp.eq.s32.totalorder %s19, 0
    %p130 = por %p128, %p129
    %s132 = sadd.s32 %s131, 1
    %p135 = scmp.eq.s32.totalorder %s13, 1
    %p136 = scmp.ne.s32.totalorder %s131, %s133
    %p137 = scmp.eq.s32.totalorder %s13, 0
    %p138 = por %p136, %p137
    %p139 = scmp.ne.s32.totalorder %s131, %s133
    %p140 = scmp.eq.s32.totalorder %s18, 1
    %p141 = por %p139, %p140
    %p142 = scmp.ne.s32.totalorder %s133, %s134
    %p143 = scmp.eq.s32.totalorder %s18, 0
    %p144 = por %p142, %p143
    %p145 = scmp.ne.s32.totalorder %s133, %s134
    %p146 = scmp.eq.s32.totalorder %s19, 1
    %p147 = por %p145, %p146
    %p149 = scmp.ne.s32.totalorder %s134, %s148
    %p150 = scmp.eq.s32.totalorder %s19, 0
    %p151 = por %p149, %p150
    %s153 = sadd.s32 %s152, 1
    %p156 = scmp.eq.s32.totalorder %s13, 1
    %p157 = scmp.ne.s32.totalorder %s152, %s154
    %p158 = scmp.eq.s32.totalorder %s13, 0
    %p159 = por %p157, %p158
    %p160 = scmp.ne.s32.totalorder %s152, %s154
    %p161 = scmp.eq.s32.totalorder %s18, 1
    %p162 = por %p160, %p161
    %p163 = scmp.ne.s32.totalorder %s154, %s155
    %p164 = scmp.eq.s32.totalorder %s18, 0
    %p165 = por %p163, %p164
    %p166 = scmp.ne.s32.totalorder %s154, %s155
    %p167 = scmp.eq.s32.totalorder %s19, 1
    %p168 = por %p166, %p167
    %p170 = scmp.ne.s32.totalorder %s155, %s169
    %p171 = scmp.eq.s32.totalorder %s19, 0
    %p172 = por %p170, %p171
    %s173 = ssub.s32 %s13, %s20
    %p174 = scmp.eq.s32.totalorder %s173, 0
    %s176 = sadd.s32 %s175, 1
    %s177 = scalar_select %p174, %s175, %s176
    %p180 = pneg %p174
    %p181 = scmp.eq.s32.totalorder %s13, 1
    %p182 = por %p180, %p181
    %p183 = scmp.ne.s32.totalorder %s175, %s178
    %p184 = scmp.eq.s32.totalorder %s13, 0
    %p185 = por %p183, %p184
    %p186 = scmp.ne.s32.totalorder %s175, %s178
    %p187 = scmp.eq.s32.totalorder %s18, 1
    %p188 = por %p186, %p187
    %p189 = scmp.ne.s32.totalorder %s178, %s179
    %p190 = scmp.eq.s32.totalorder %s18, 0
    %p191 = por %p189, %p190
    %p192 = scmp.ne.s32.totalorder %s178, %s179
    %p193 = scmp.eq.s32.totalorder %s19, 1
    %p194 = por %p192, %p193
    %p196 = scmp.ne.s32.totalorder %s179, %s195
    %p197 = scmp.eq.s32.totalorder %s19, 0
    %p198 = por %p196, %p197
    %p199 = scmp.le.s32.totalorder 1, %s13
    %p200 = scmp.lt.s32.totalorder %s13, 3
    %p201 = pnand %p199, %p200
    %p202 = pneg %p201
    // Predicated region
    $region9: #{tpu_custom_call.1} parent=5 // pred_check
      _
    $region10: #{tpu_custom_call.1} parent=5 // pred_check_branch
      %204 = sbr.rel (%p201) target = $region12
    $region11: #{tpu_custom_call.1} parent=5 // pred_region
      %s205 = ssub.s32 %s13, 1
      // Predicated region
      $region13: #{tpu_custom_call.1} parent=11 // pred_check
        %p206 = pneg %p60
      $region14: #{tpu_custom_call.1} parent=11 // pred_check_branch
        %208 = sbr.rel (%p206) target = $region16
      $region15: #{tpu_custom_call.1} parent=11 // pred_region
        _
      $region16: #{tpu_custom_call.1} parent=11 // pred_fallthru
        _
      // Predicated region
      $region17: #{tpu_custom_call.1} parent=11 // pred_check
        %p209 = pneg %p81
      $region18: #{tpu_custom_call.1} parent=11 // pred_check_branch
        %211 = sbr.rel (%p209) target = $region20
      $region19: #{tpu_custom_call.1} parent=11 // pred_region
        _
      $region20: #{tpu_custom_call.1} parent=11 // pred_fallthru
        _
      // Predicated region
      $region21: #{tpu_custom_call.1} parent=11 // pred_check
        %p212 = pneg %p102
      $region22: #{tpu_custom_call.1} parent=11 // pred_check_branch
        %214 = sbr.rel (%p212) target = $region24
      $region23: #{tpu_custom_call.1} parent=11 // pred_region
        _
      $region24: #{tpu_custom_call.1} parent=11 // pred_fallthru
        _
      // Predicated region
      $region25: #{tpu_custom_call.1} parent=11 // pred_check
        %p215 = pneg %p123
      $region26: #{tpu_custom_call.1} parent=11 // pred_check_branch
        %217 = sbr.rel (%p215) target = $region28
      $region27: #{tpu_custom_call.1} parent=11 // pred_region
        _
      $region28: #{tpu_custom_call.1} parent=11 // pred_fallthru
        _
      // Predicated region
      $region29: #{tpu_custom_call.1} parent=11 // pred_check
        %p218 = pneg %p144
      $region30: #{tpu_custom_call.1} parent=11 // pred_check_branch
        %220 = sbr.rel (%p218) target = $region32
      $region31: #{tpu_custom_call.1} parent=11 // pred_region
        _
      $region32: #{tpu_custom_call.1} parent=11 // pred_fallthru
        _
      // Predicated region
      $region33: #{tpu_custom_call.1} parent=11 // pred_check
        %p221 = pneg %p165
      $region34: #{tpu_custom_call.1} parent=11 // pred_check_branch
        %223 = sbr.rel (%p221) target = $region36
      $region35: #{tpu_custom_call.1} parent=11 // pred_region
        _
      $region36: #{tpu_custom_call.1} parent=11 // pred_fallthru
        _
    $region12: #{tpu_custom_call.1} parent=5 // pred_fallthru
      _
    %p224 = scmp.lt.s32.totalorder %s13, 2
    // Predicated region
    $region37: #{tpu_custom_call.1} parent=5 // pred_check
      %p225 = pneg %p224
    $region38: #{tpu_custom_call.1} parent=5 // pred_check_branch
      %227 = sbr.rel (%p225) target = $region40
    $region39: #{tpu_custom_call.1} parent=5 // pred_region
      // Predicated region
      $region41: #{tpu_custom_call.1} parent=39 // pred_check
        %p228 = pneg %p33
      $region42: #{tpu_custom_call.1} parent=39 // pred_check_branch
        %230 = sbr.rel (%p228) target = $region44
      $region43: #{tpu_custom_call.1} parent=39 // pred_region
        %s231 = smul.u32 16, %s13
        %p232 = scmp.lt.s32.totalorder %s231, 31
        %s233 = scalar_select %p232, %s231, 31
        %s234 = smul.addr %s233, 8
        %s235 = scalar_lea.vmem %s0, %s234
        %s236 = smul.u32 16, %s13
      $region44: #{tpu_custom_call.1} parent=39 // pred_fallthru
        _
    $region40: #{tpu_custom_call.1} parent=5 // pred_fallthru
      _
    %p237 = scmp.le.s32.totalorder 1, %s13
    %p238 = scmp.lt.s32.totalorder %s13, 3
    %p239 = pnand %p237, %p238
    %p240 = pneg %p239
    // Predicated region
    $region45: #{tpu_custom_call.1} parent=5 // pred_check
      _
    $region46: #{tpu_custom_call.1} parent=5 // pred_check_branch
      %242 = sbr.rel (%p239) target = $region48
    $region47: #{tpu_custom_call.1} parent=5 // pred_region
      %s243 = ssub.s32 %s13, 1
      %s244 = smul.u32 16, %s18
      %p245 = scmp.lt.s32.totalorder %s244, 31
      %s246 = scalar_select %p245, %s244, 31
      %s247 = smul.addr %s246, 8
      %s248 = scalar_lea.vmem %s0, %s247
      %p249 = pneg %p39
      %p250 = pneg %p36
      %p251 = pneg %p60
      %p252 = pneg %p57
      %p253 = pneg %p81
      %p254 = pneg %p78
      %p255 = pneg %p102
      %p256 = pneg %p99
      %p257 = pneg %p123
      %p258 = pneg %p120
      %p259 = pneg %p144
      %p260 = pneg %p141
      %p261 = pneg %p165
      %p262 = pneg %p162
      %p263 = pneg %p191
      %p264 = pneg %p188
      %s265 = smul.u32 16, %s18
      %p266 = scmp.lt.s32.totalorder %s265, 31
      %s267 = scalar_select %p266, %s265, 31
      %s268 = smul.addr %s267, 8
      %s269 = scalar_lea.vmem %s7, %s268
      %s270 = smul.u32 16, %s18
      %p271 = scmp.lt.s32.totalorder %s270, 31
      %s272 = scalar_select %p271, %s270, 31
      %s273 = smul.addr %s272, 8
      %s274 = scalar_lea.vmem %s0, %s273
      %s275 = smul.u32 16, %s18
      %s276 = smul.u32 16, %s18
      %p277 = scmp.lt.s32.totalorder %s276, 31
      %s278 = scalar_select %p277, %s276, 31
      %s279 = smul.addr %s278, 8
      %s280 = scalar_lea.vmem %s7, %s279
      %s281 = smul.u32 16, %s18
      %v282 = vld [vmem:[%s274] sm:$0xff]
      %v283 = vld [vmem:[%s274 + $0x8] sm:$0xff]
      %v284 = vld [vmem:[%s274 + $0x10] sm:$0xff]
      %v285 = vld [vmem:[%s274 + $0x18] sm:$0xff]
      %v286 = vld [vmem:[%s274 + $0x20] sm:$0xff]
      %v287 = vld [vmem:[%s274 + $0x28] sm:$0xff]
      %v288 = vld [vmem:[%s274 + $0x30] sm:$0xff]
      %v289 = vld [vmem:[%s274 + $0x38] sm:$0xff]
      %v290 = vld [vmem:[%s274 + $0x40] sm:$0xff]
      %v291 = vld [vmem:[%s274 + $0x48] sm:$0xff]
      %v292 = vld [vmem:[%s274 + $0x50] sm:$0xff]
      %v293 = vld [vmem:[%s274 + $0x58] sm:$0xff]
      %v294 = vld [vmem:[%s274 + $0x60] sm:$0xff]
      %v295 = vld [vmem:[%s274 + $0x68] sm:$0xff]
      %v296 = vld [vmem:[%s274 + $0x70] sm:$0xff]
      %v297 = vld [vmem:[%s274 + $0x78] sm:$0xff]
      %v298 = vld [vmem:[%s1] sm:$0xff]
      %v299 = vld [vmem:[%s1 + $0x8] sm:$0xff]
      %v300 = vld [vmem:[%s1 + $0x10] sm:$0xff]
      %v301 = vld [vmem:[%s1 + $0x18] sm:$0xff]
      %v302 = vld [vmem:[%s1 + $0x20] sm:$0xff]
      %v303 = vld [vmem:[%s1 + $0x28] sm:$0xff]
      %v304 = vld [vmem:[%s1 + $0x30] sm:$0xff]
      %v305 = vld [vmem:[%s1 + $0x38] sm:$0xff]
      %v306 = vld [vmem:[%s2] sm:$0x1]
      %v308 = vlaneseq
      %v309 = vshrl.u32 %v308, 7
      %v310 = vsub.s32 0, %v309
      %v311 = vrot.slane %v306, %v310
      %vm313 = vcmask 261120
      %v315 = vsel %vm313, %v282, 0
      %v318 = vsel %vm313, %v283, 0
      %v321 = vsel %vm313, %v284, 0
      %v324 = vsel %vm313, %v285, 0
      %v327 = vsel %vm313, %v286, 0
      %v330 = vsel %vm313, %v287, 0
      %v333 = vsel %vm313, %v288, 0
      %v336 = vsel %vm313, %v289, 0
      %v339 = vsel %vm313, %v290, 0
      %v342 = vsel %vm313, %v291, 0
      %v345 = vsel %vm313, %v292, 0
      %v348 = vsel %vm313, %v293, 0
      %v351 = vsel %vm313, %v294, 0
      %v354 = vsel %vm313, %v295, 0
      %v357 = vsel %vm313, %v296, 0
      %v360 = vsel %vm313, %v297, 0
      %v363 = vsel %vm313, %v298, 0
      %v366 = vsel %vm313, %v299, 0
      %v369 = vsel %vm313, %v300, 0
      %v372 = vsel %vm313, %v301, 0
      %v375 = vsel %vm313, %v302, 0
      %v378 = vsel %vm313, %v303, 0
      %v381 = vsel %vm313, %v304, 0
      %v384 = vsel %vm313, %v305, 0
      %386 = vmatprep.subr.mxu0 0.0
      %387 = vmatpush1.xpose.msra.mxu0 0.0
      %388 = vmatprep.subr.mxu0 0.0
      %389 = vmatpush1.xpose.msra.mxu0 0.0
      %390 = vmatprep.subr.mxu0 0.0
      %391 = vmatpush1.xpose.msra.mxu0 0.0
      %392 = vmatprep.subr.mxu0 0.0
      %393 = vmatpush1.xpose.msra.mxu0 0.0
      %394 = vmatprep.subr.mxu0 0.0
      %395 = vmatpush1.xpose.msra.mxu0 0.0
      %396 = vmatprep.subr.mxu0 0.0
      %397 = vmatpush1.xpose.msra.mxu0 0.0
      %398 = vmatprep.subr.mxu0 0.0
      %399 = vmatpush1.xpose.msra.mxu0 0.0
      %400 = vmatprep.subr.mxu0 0.0
      %401 = vmatpush1.xpose.msra.mxu0 0.0
      %402 = vmatprep.subr.mxu0 0.0
      %403 = vmatpush1.xpose.msra.mxu0 %v384
      %404 = vmatprep.subr.mxu0 0.0
      %405 = vmatpush1.xpose.msra.mxu0 %v381
      %406 = vmatprep.subr.mxu0 0.0
      %407 = vmatpush1.xpose.msra.mxu0 %v378
      %408 = vmatprep.subr.mxu0 0.0
      %409 = vmatpush1.xpose.msra.mxu0 %v375
      %410 = vmatprep.subr.mxu0 0.0
      %411 = vmatpush1.xpose.msra.mxu0 %v372
      %412 = vmatprep.subr.mxu0 0.0
      %413 = vmatpush1.xpose.msra.mxu0 %v369
      %414 = vmatprep.subr.mxu0 0.0
      %415 = vmatpush1.xpose.msra.mxu0 %v366
      %416 = vmatprep.subr.mxu0 0.0
      %417 = vmatpush1.xpose.msra.mxu0 %v363
      %418 = vmatprep.subr.mxu0 0.0
      %419 = vmatpush2.xpose.msra.mxu0 0.0
      %420 = vmatprep.subr.mxu0 0.0
      %421 = vmatpush2.xpose.msra.mxu0 0.0
      %422 = vmatprep.subr.mxu0 0.0
      %423 = vmatpush2.xpose.msra.mxu0 0.0
      %424 = vmatprep.subr.mxu0 0.0
      %425 = vmatpush2.xpose.msra.mxu0 0.0
      %426 = vmatprep.subr.mxu0 0.0
      %427 = vmatpush2.xpose.msra.mxu0 0.0
      %428 = vmatprep.subr.mxu0 0.0
      %429 = vmatpush2.xpose.msra.mxu0 0.0
      %430 = vmatprep.subr.mxu0 0.0
      %431 = vmatpush2.xpose.msra.mxu0 0.0
      %432 = vmatprep.subr.mxu0 0.0
      %433 = vmatpush2.xpose.msra.mxu0 0.0
      %434 = vmatprep.subr.mxu0 0.0
      %435 = vmatpush2.xpose.msra.mxu0 0.0
      %436 = vmatprep.subr.mxu0 0.0
      %437 = vmatpush2.xpose.msra.mxu0 0.0
      %438 = vmatprep.subr.mxu0 0.0
      %439 = vmatpush2.xpose.msra.mxu0 0.0
      %440 = vmatprep.subr.mxu0 0.0
      %441 = vmatpush2.xpose.msra.mxu0 0.0
      %442 = vmatprep.subr.mxu0 0.0
      %443 = vmatpush2.xpose.msra.mxu0 0.0
      %444 = vmatprep.subr.mxu0 0.0
      %445 = vmatpush2.xpose.msra.mxu0 0.0
      %446 = vmatprep.subr.mxu0 0.0
      %447 = vmatpush2.xpose.msra.mxu0 0.0
      %448 = vmatprep.subr.mxu0 0.0
      %449 = vmatpush2.xpose.msra.mxu0 0.0
      %450 = vmatprep.mubr.f32.mxu0 0.0
      %451 = vmatmul.mubr.f32.gmra.mxu0 %v315
      %v452 = vpop.f32.mrf.mxu0
      %v453 = vadd.f32 %v311, %v452
      %v454 = vpop.f32.mrf.mxu0
      %455 = vmatprep.mubr.f32.mxu0 0.0
      %456 = vmatmul.mubr.f32.gmra.mxu0 %v318
      %v457 = vpop.f32.mrf.mxu0
      %v458 = vadd.f32 %v311, %v457
      %v459 = vpop.f32.mrf.mxu0
      %460 = vmatprep.mubr.f32.mxu0 0.0
      %461 = vmatmul.mubr.f32.gmra.mxu0 %v321
      %v462 = vpop.f32.mrf.mxu0
      %v463 = vadd.f32 %v311, %v462
      %v464 = vpop.f32.mrf.mxu0
      %465 = vmatprep.mubr.f32.mxu0 0.0
      %466 = vmatmul.mubr.f32.gmra.mxu0 %v324
      %v467 = vpop.f32.mrf.mxu0
      %v468 = vadd.f32 %v311, %v467
      %v469 = vpop.f32.mrf.mxu0
      %470 = vmatprep.mubr.f32.mxu0 0.0
      %471 = vmatmul.mubr.f32.gmra.mxu0 %v327
      %v472 = vpop.f32.mrf.mxu0
      %v473 = vadd.f32 %v311, %v472
      %v474 = vpop.f32.mrf.mxu0
      %475 = vmatprep.mubr.f32.mxu0 0.0
      %476 = vmatmul.mubr.f32.gmra.mxu0 %v330
      %v477 = vpop.f32.mrf.mxu0
      %v478 = vadd.f32 %v311, %v477
      %v479 = vpop.f32.mrf.mxu0
      %480 = vmatprep.mubr.f32.mxu0 0.0
      %481 = vmatmul.mubr.f32.gmra.mxu0 %v333
      %v482 = vpop.f32.mrf.mxu0
      %v483 = vadd.f32 %v311, %v482
      %v484 = vpop.f32.mrf.mxu0
      %485 = vmatprep.mubr.f32.mxu0 0.0
      %486 = vmatmul.mubr.f32.gmra.mxu0 %v336
      %v487 = vpop.f32.mrf.mxu0
      %v488 = vadd.f32 %v311, %v487
      %v489 = vpop.f32.mrf.mxu0
      %490 = vmatprep.mubr.f32.mxu0 0.0
      %491 = vmatmul.mubr.f32.gmra.mxu0 %v339
      %v492 = vpop.f32.mrf.mxu0
      %v493 = vadd.f32 %v311, %v492
      %v494 = vpop.f32.mrf.mxu0
      %495 = vmatprep.mubr.f32.mxu0 0.0
      %496 = vmatmul.mubr.f32.gmra.mxu0 %v342
      %v497 = vpop.f32.mrf.mxu0
      %v498 = vadd.f32 %v311, %v497
      %v499 = vpop.f32.mrf.mxu0
      %500 = vmatprep.mubr.f32.mxu0 0.0
      %501 = vmatmul.mubr.f32.gmra.mxu0 %v345
      %v502 = vpop.f32.mrf.mxu0
      %v503 = vadd.f32 %v311, %v502
      %v504 = vpop.f32.mrf.mxu0
      %505 = vmatprep.mubr.f32.mxu0 0.0
      %506 = vmatmul.mubr.f32.gmra.mxu0 %v348
      %v507 = vpop.f32.mrf.mxu0
      %v508 = vadd.f32 %v311, %v507
      %v509 = vpop.f32.mrf.mxu0
      %510 = vmatprep.mubr.f32.mxu0 0.0
      %511 = vmatmul.mubr.f32.gmra.mxu0 %v351
      %v512 = vpop.f32.mrf.mxu0
      %v513 = vadd.f32 %v311, %v512
      %v514 = vpop.f32.mrf.mxu0
      %515 = vmatprep.mubr.f32.mxu0 0.0
      %516 = vmatmul.mubr.f32.gmra.mxu0 %v354
      %v517 = vpop.f32.mrf.mxu0
      %v518 = vadd.f32 %v311, %v517
      %v519 = vpop.f32.mrf.mxu0
      %520 = vmatprep.mubr.f32.mxu0 0.0
      %521 = vmatmul.mubr.f32.gmra.mxu0 %v357
      %v522 = vpop.f32.mrf.mxu0
      %v523 = vadd.f32 %v311, %v522
      %v524 = vpop.f32.mrf.mxu0
      %525 = vmatprep.mubr.f32.mxu0 0.0
      %526 = vmatmul.mubr.f32.gmra.mxu0 %v360
      %v527 = vpop.f32.mrf.mxu0
      %v528 = vadd.f32 %v311, %v527
      %v529 = vpop.f32.mrf.mxu0
      %530 = vdwg.mxu0
      %v531 = vmax.f32 %v453, 0.0
      %v532 = vmax.f32 %v458, 0.0
      %v533 = vmax.f32 %v463, 0.0
      %v534 = vmax.f32 %v468, 0.0
      %v535 = vmax.f32 %v473, 0.0
      %v536 = vmax.f32 %v478, 0.0
      %v537 = vmax.f32 %v483, 0.0
      %v538 = vmax.f32 %v488, 0.0
      %v539 = vmax.f32 %v493, 0.0
      %v540 = vmax.f32 %v498, 0.0
      %v541 = vmax.f32 %v503, 0.0
      %v542 = vmax.f32 %v508, 0.0
      %v543 = vmax.f32 %v513, 0.0
      %v544 = vmax.f32 %v518, 0.0
      %v545 = vmax.f32 %v523, 0.0
      %v546 = vmax.f32 %v528, 0.0
      %v547 = vld [vmem:[%s3] sm:$0xff]
      %v548 = vld [vmem:[%s3 + $0x8] sm:$0xff]
      %v549 = vld [vmem:[%s3 + $0x10] sm:$0xff]
      %v550 = vld [vmem:[%s3 + $0x18] sm:$0xff]
      %v551 = vld [vmem:[%s3 + $0x20] sm:$0xff]
      %v552 = vld [vmem:[%s3 + $0x28] sm:$0xff]
      %v553 = vld [vmem:[%s3 + $0x30] sm:$0xff]
      %v554 = vld [vmem:[%s3 + $0x38] sm:$0xff]
      %v555 = vld [vmem:[%s4] sm:$0x1]
      %v557 = vlaneseq
      %v558 = vshrl.u32 %v557, 7
      %v559 = vsub.s32 0, %v558
      %v560 = vrot.slane %v555, %v559
      %vm562 = vcmask 523264
      %v564 = vsel %vm562, %v531, 0
      %v567 = vsel %vm562, %v532, 0
      %v570 = vsel %vm562, %v533, 0
      %v573 = vsel %vm562, %v534, 0
      %v576 = vsel %vm562, %v535, 0
      %v579 = vsel %vm562, %v536, 0
      %v582 = vsel %vm562, %v537, 0
      %v585 = vsel %vm562, %v538, 0
      %v588 = vsel %vm562, %v539, 0
      %v591 = vsel %vm562, %v540, 0
      %v594 = vsel %vm562, %v541, 0
      %v597 = vsel %vm562, %v542, 0
      %v600 = vsel %vm562, %v543, 0
      %v603 = vsel %vm562, %v544, 0
      %v606 = vsel %vm562, %v545, 0
      %v609 = vsel %vm562, %v546, 0
      %v612 = vsel %vm562, %v547, 0
      %v615 = vsel %vm562, %v548, 0
      %v618 = vsel %vm562, %v549, 0
      %v621 = vsel %vm562, %v550, 0
      %v624 = vsel %vm562, %v551, 0
      %v627 = vsel %vm562, %v552, 0
      %v630 = vsel %vm562, %v553, 0
      %v633 = vsel %vm562, %v554, 0
      %635 = vmatprep.subr.mxu0 0.0
      %636 = vmatpush1.xpose.msra.mxu0 0.0
      %637 = vmatprep.subr.mxu0 0.0
      %638 = vmatpush1.xpose.msra.mxu0 0.0
      %639 = vmatprep.subr.mxu0 0.0
      %640 = vmatpush1.xpose.msra.mxu0 0.0
      %641 = vmatprep.subr.mxu0 0.0
      %642 = vmatpush1.xpose.msra.mxu0 0.0
      %643 = vmatprep.subr.mxu0 0.0
      %644 = vmatpush1.xpose.msra.mxu0 0.0
      %645 = vmatprep.subr.mxu0 0.0
      %646 = vmatpush1.xpose.msra.mxu0 0.0
      %647 = vmatprep.subr.mxu0 0.0
      %648 = vmatpush1.xpose.msra.mxu0 0.0
      %649 = vmatprep.subr.mxu0 0.0
      %650 = vmatpush1.xpose.msra.mxu0 0.0
      %651 = vmatprep.subr.mxu0 0.0
      %652 = vmatpush1.xpose.msra.mxu0 %v633
      %653 = vmatprep.subr.mxu0 0.0
      %654 = vmatpush1.xpose.msra.mxu0 %v630
      %655 = vmatprep.subr.mxu0 0.0
      %656 = vmatpush1.xpose.msra.mxu0 %v627
      %657 = vmatprep.subr.mxu0 0.0
      %658 = vmatpush1.xpose.msra.mxu0 %v624
      %659 = vmatprep.subr.mxu0 0.0
      %660 = vmatpush1.xpose.msra.mxu0 %v621
      %661 = vmatprep.subr.mxu0 0.0
      %662 = vmatpush1.xpose.msra.mxu0 %v618
      %663 = vmatprep.subr.mxu0 0.0
      %664 = vmatpush1.xpose.msra.mxu0 %v615
      %665 = vmatprep.subr.mxu0 0.0
      %666 = vmatpush1.xpose.msra.mxu0 %v612
      %667 = vmatprep.subr.mxu0 0.0
      %668 = vmatpush2.xpose.msra.mxu0 0.0
      %669 = vmatprep.subr.mxu0 0.0
      %670 = vmatpush2.xpose.msra.mxu0 0.0
      %671 = vmatprep.subr.mxu0 0.0
      %672 = vmatpush2.xpose.msra.mxu0 0.0
      %673 = vmatprep.subr.mxu0 0.0
      %674 = vmatpush2.xpose.msra.mxu0 0.0
      %675 = vmatprep.subr.mxu0 0.0
      %676 = vmatpush2.xpose.msra.mxu0 0.0
      %677 = vmatprep.subr.mxu0 0.0
      %678 = vmatpush2.xpose.msra.mxu0 0.0
      %679 = vmatprep.subr.mxu0 0.0
      %680 = vmatpush2.xpose.msra.mxu0 0.0
      %681 = vmatprep.subr.mxu0 0.0
      %682 = vmatpush2.xpose.msra.mxu0 0.0
      %683 = vmatprep.subr.mxu0 0.0
      %684 = vmatpush2.xpose.msra.mxu0 0.0
      %685 = vmatprep.subr.mxu0 0.0
      %686 = vmatpush2.xpose.msra.mxu0 0.0
      %687 = vmatprep.subr.mxu0 0.0
      %688 = vmatpush2.xpose.msra.mxu0 0.0
      %689 = vmatprep.subr.mxu0 0.0
      %690 = vmatpush2.xpose.msra.mxu0 0.0
      %691 = vmatprep.subr.mxu0 0.0
      %692 = vmatpush2.xpose.msra.mxu0 0.0
      %693 = vmatprep.subr.mxu0 0.0
      %694 = vmatpush2.xpose.msra.mxu0 0.0
      %695 = vmatprep.subr.mxu0 0.0
      %696 = vmatpush2.xpose.msra.mxu0 0.0
      %697 = vmatprep.subr.mxu0 0.0
      %698 = vmatpush2.xpose.msra.mxu0 0.0
      %699 = vmatprep.mubr.f32.mxu0 0.0
      %700 = vmatmul.mubr.f32.gmra.mxu0 %v564
      %v701 = vpop.f32.mrf.mxu0
      %v702 = vadd.f32 %v560, %v701
      %v703 = vpop.f32.mrf.mxu0
      %704 = vmatprep.mubr.f32.mxu0 0.0
      %705 = vmatmul.mubr.f32.gmra.mxu0 %v567
      %v706 = vpop.f32.mrf.mxu0
      %v707 = vadd.f32 %v560, %v706
      %v708 = vpop.f32.mrf.mxu0
      %709 = vmatprep.mubr.f32.mxu0 0.0
      %710 = vmatmul.mubr.f32.gmra.mxu0 %v570
      %v711 = vpop.f32.mrf.mxu0
      %v712 = vadd.f32 %v560, %v711
      %v713 = vpop.f32.mrf.mxu0
      %714 = vmatprep.mubr.f32.mxu0 0.0
      %715 = vmatmul.mubr.f32.gmra.mxu0 %v573
      %v716 = vpop.f32.mrf.mxu0
      %v717 = vadd.f32 %v560, %v716
      %v718 = vpop.f32.mrf.mxu0
      %719 = vmatprep.mubr.f32.mxu0 0.0
      %720 = vmatmul.mubr.f32.gmra.mxu0 %v576
      %v721 = vpop.f32.mrf.mxu0
      %v722 = vadd.f32 %v560, %v721
      %v723 = vpop.f32.mrf.mxu0
      %724 = vmatprep.mubr.f32.mxu0 0.0
      %725 = vmatmul.mubr.f32.gmra.mxu0 %v579
      %v726 = vpop.f32.mrf.mxu0
      %v727 = vadd.f32 %v560, %v726
      %v728 = vpop.f32.mrf.mxu0
      %729 = vmatprep.mubr.f32.mxu0 0.0
      %730 = vmatmul.mubr.f32.gmra.mxu0 %v582
      %v731 = vpop.f32.mrf.mxu0
      %v732 = vadd.f32 %v560, %v731
      %v733 = vpop.f32.mrf.mxu0
      %734 = vmatprep.mubr.f32.mxu0 0.0
      %735 = vmatmul.mubr.f32.gmra.mxu0 %v585
      %v736 = vpop.f32.mrf.mxu0
      %v737 = vadd.f32 %v560, %v736
      %v738 = vpop.f32.mrf.mxu0
      %739 = vmatprep.mubr.f32.mxu0 0.0
      %740 = vmatmul.mubr.f32.gmra.mxu0 %v588
      %v741 = vpop.f32.mrf.mxu0
      %v742 = vadd.f32 %v560, %v741
      %v743 = vpop.f32.mrf.mxu0
      %744 = vmatprep.mubr.f32.mxu0 0.0
      %745 = vmatmul.mubr.f32.gmra.mxu0 %v591
      %v746 = vpop.f32.mrf.mxu0
      %v747 = vadd.f32 %v560, %v746
      %v748 = vpop.f32.mrf.mxu0
      %749 = vmatprep.mubr.f32.mxu0 0.0
      %750 = vmatmul.mubr.f32.gmra.mxu0 %v594
      %v751 = vpop.f32.mrf.mxu0
      %v752 = vadd.f32 %v560, %v751
      %v753 = vpop.f32.mrf.mxu0
      %754 = vmatprep.mubr.f32.mxu0 0.0
      %755 = vmatmul.mubr.f32.gmra.mxu0 %v597
      %v756 = vpop.f32.mrf.mxu0
      %v757 = vadd.f32 %v560, %v756
      %v758 = vpop.f32.mrf.mxu0
      %759 = vmatprep.mubr.f32.mxu0 0.0
      %760 = vmatmul.mubr.f32.gmra.mxu0 %v600
      %v761 = vpop.f32.mrf.mxu0
      %v762 = vadd.f32 %v560, %v761
      %v763 = vpop.f32.mrf.mxu0
      %764 = vmatprep.mubr.f32.mxu0 0.0
      %765 = vmatmul.mubr.f32.gmra.mxu0 %v603
      %v766 = vpop.f32.mrf.mxu0
      %v767 = vadd.f32 %v560, %v766
      %v768 = vpop.f32.mrf.mxu0
      %769 = vmatprep.mubr.f32.mxu0 0.0
      %770 = vmatmul.mubr.f32.gmra.mxu0 %v606
      %v771 = vpop.f32.mrf.mxu0
      %v772 = vadd.f32 %v560, %v771
      %v773 = vpop.f32.mrf.mxu0
      %774 = vmatprep.mubr.f32.mxu0 0.0
      %775 = vmatmul.mubr.f32.gmra.mxu0 %v609
      %v776 = vpop.f32.mrf.mxu0
      %v777 = vadd.f32 %v560, %v776
      %v778 = vpop.f32.mrf.mxu0
      %779 = vdwg.mxu0
      %v780 = vmax.f32 %v702, 0.0
      %v781 = vmax.f32 %v707, 0.0
      %v782 = vmax.f32 %v712, 0.0
      %v783 = vmax.f32 %v717, 0.0
      %v784 = vmax.f32 %v722, 0.0
      %v785 = vmax.f32 %v727, 0.0
      %v786 = vmax.f32 %v732, 0.0
      %v787 = vmax.f32 %v737, 0.0
      %v788 = vmax.f32 %v742, 0.0
      %v789 = vmax.f32 %v747, 0.0
      %v790 = vmax.f32 %v752, 0.0
      %v791 = vmax.f32 %v757, 0.0
      %v792 = vmax.f32 %v762, 0.0
      %v793 = vmax.f32 %v767, 0.0
      %v794 = vmax.f32 %v772, 0.0
      %v795 = vmax.f32 %v777, 0.0
      %v796 = vld [vmem:[%s5] sm:$0xff]
      %v797 = vld [vmem:[%s6] sm:$0x1]
      %v799 = vlaneseq
      %v800 = vshrl.u32 %v799, 7
      %v801 = vsub.s32 0, %v800
      %v802 = vrot.slane %v797, %v801
      %v805 = vsel %vm562, %v780, 0
      %v808 = vsel %vm562, %v781, 0
      %v811 = vsel %vm562, %v782, 0
      %v814 = vsel %vm562, %v783, 0
      %v817 = vsel %vm562, %v784, 0
      %v820 = vsel %vm562, %v785, 0
      %v823 = vsel %vm562, %v786, 0
      %v826 = vsel %vm562, %v787, 0
      %v829 = vsel %vm562, %v788, 0
      %v832 = vsel %vm562, %v789, 0
      %v835 = vsel %vm562, %v790, 0
      %v838 = vsel %vm562, %v791, 0
      %v841 = vsel %vm562, %v792, 0
      %v844 = vsel %vm562, %v793, 0
      %v847 = vsel %vm562, %v794, 0
      %v850 = vsel %vm562, %v795, 0
      %v853 = vsel %vm562, %v796, 0
      %855 = vmatprep.subr.mxu0 0.0
      %856 = vmatpush1.xpose.msra.mxu0 0.0
      %857 = vmatprep.subr.mxu0 0.0
      %858 = vmatpush1.xpose.msra.mxu0 0.0
      %859 = vmatprep.subr.mxu0 0.0
      %860 = vmatpush1.xpose.msra.mxu0 0.0
      %861 = vmatprep.subr.mxu0 0.0
      %862 = vmatpush1.xpose.msra.mxu0 0.0
      %863 = vmatprep.subr.mxu0 0.0
      %864 = vmatpush1.xpose.msra.mxu0 0.0
      %865 = vmatprep.subr.mxu0 0.0
      %866 = vmatpush1.xpose.msra.mxu0 0.0
      %867 = vmatprep.subr.mxu0 0.0
      %868 = vmatpush1.xpose.msra.mxu0 0.0
      %869 = vmatprep.subr.mxu0 0.0
      %870 = vmatpush1.xpose.msra.mxu0 0.0
      %871 = vmatprep.subr.mxu0 0.0
      %872 = vmatpush1.xpose.msra.mxu0 0.0
      %873 = vmatprep.subr.mxu0 0.0
      %874 = vmatpush1.xpose.msra.mxu0 0.0
      %875 = vmatprep.subr.mxu0 0.0
      %876 = vmatpush1.xpose.msra.mxu0 0.0
      %877 = vmatprep.subr.mxu0 0.0
      %878 = vmatpush1.xpose.msra.mxu0 0.0
      %879 = vmatprep.subr.mxu0 0.0
      %880 = vmatpush1.xpose.msra.mxu0 0.0
      %881 = vmatprep.subr.mxu0 0.0
      %882 = vmatpush1.xpose.msra.mxu0 0.0
      %883 = vmatprep.subr.mxu0 0.0
      %884 = vmatpush1.xpose.msra.mxu0 0.0
      %885 = vmatprep.subr.mxu0 0.0
      %886 = vmatpush1.xpose.msra.mxu0 %v853
      %887 = vmatprep.subr.mxu0 0.0
      %888 = vmatpush2.xpose.msra.mxu0 0.0
      %889 = vmatprep.subr.mxu0 0.0
      %890 = vmatpush2.xpose.msra.mxu0 0.0
      %891 = vmatprep.subr.mxu0 0.0
      %892 = vmatpush2.xpose.msra.mxu0 0.0
      %893 = vmatprep.subr.mxu0 0.0
      %894 = vmatpush2.xpose.msra.mxu0 0.0
      %895 = vmatprep.subr.mxu0 0.0
      %896 = vmatpush2.xpose.msra.mxu0 0.0
      %897 = vmatprep.subr.mxu0 0.0
      %898 = vmatpush2.xpose.msra.mxu0 0.0
      %899 = vmatprep.subr.mxu0 0.0
      %900 = vmatpush2.xpose.msra.mxu0 0.0
      %901 = vmatprep.subr.mxu0 0.0
      %902 = vmatpush2.xpose.msra.mxu0 0.0
      %903 = vmatprep.subr.mxu0 0.0
      %904 = vmatpush2.xpose.msra.mxu0 0.0
      %905 = vmatprep.subr.mxu0 0.0
      %906 = vmatpush2.xpose.msra.mxu0 0.0
      %907 = vmatprep.subr.mxu0 0.0
      %908 = vmatpush2.xpose.msra.mxu0 0.0
      %909 = vmatprep.subr.mxu0 0.0
      %910 = vmatpush2.xpose.msra.mxu0 0.0
      %911 = vmatprep.subr.mxu0 0.0
      %912 = vmatpush2.xpose.msra.mxu0 0.0
      %913 = vmatprep.subr.mxu0 0.0
      %914 = vmatpush2.xpose.msra.mxu0 0.0
      %915 = vmatprep.subr.mxu0 0.0
      %916 = vmatpush2.xpose.msra.mxu0 0.0
      %917 = vmatprep.subr.mxu0 0.0
      %918 = vmatpush2.xpose.msra.mxu0 0.0
      %919 = vmatprep.mubr.f32.mxu0 0.0
      %920 = vmatmul.mubr.f32.gmra.mxu0 %v805
      %v921 = vpop.f32.mrf.mxu0
      %v922 = vadd.f32 %v802, %v921
      %v923 = vpop.f32.mrf.mxu0
      %924 = vmatprep.mubr.f32.mxu0 0.0
      %925 = vmatmul.mubr.f32.gmra.mxu0 %v808
      %v926 = vpop.f32.mrf.mxu0
      %v927 = vadd.f32 %v802, %v926
      %v928 = vpop.f32.mrf.mxu0
      %929 = vmatprep.mubr.f32.mxu0 0.0
      %930 = vmatmul.mubr.f32.gmra.mxu0 %v811
      %v931 = vpop.f32.mrf.mxu0
      %v932 = vadd.f32 %v802, %v931
      %v933 = vpop.f32.mrf.mxu0
      %934 = vmatprep.mubr.f32.mxu0 0.0
      %935 = vmatmul.mubr.f32.gmra.mxu0 %v814
      %v936 = vpop.f32.mrf.mxu0
      %v937 = vadd.f32 %v802, %v936
      %v938 = vpop.f32.mrf.mxu0
      %939 = vmatprep.mubr.f32.mxu0 0.0
      %940 = vmatmul.mubr.f32.gmra.mxu0 %v817
      %v941 = vpop.f32.mrf.mxu0
      %v942 = vadd.f32 %v802, %v941
      %v943 = vpop.f32.mrf.mxu0
      %944 = vmatprep.mubr.f32.mxu0 0.0
      %945 = vmatmul.mubr.f32.gmra.mxu0 %v820
      %v946 = vpop.f32.mrf.mxu0
      %v947 = vadd.f32 %v802, %v946
      %v948 = vpop.f32.mrf.mxu0
      %949 = vmatprep.mubr.f32.mxu0 0.0
      %950 = vmatmul.mubr.f32.gmra.mxu0 %v823
      %v951 = vpop.f32.mrf.mxu0
      %v952 = vadd.f32 %v802, %v951
      %v953 = vpop.f32.mrf.mxu0
      %954 = vmatprep.mubr.f32.mxu0 0.0
      %955 = vmatmul.mubr.f32.gmra.mxu0 %v826
      %v956 = vpop.f32.mrf.mxu0
      %v957 = vadd.f32 %v802, %v956
      %v958 = vpop.f32.mrf.mxu0
      %959 = vmatprep.mubr.f32.mxu0 0.0
      %960 = vmatmul.mubr.f32.gmra.mxu0 %v829
      %v961 = vpop.f32.mrf.mxu0
      %v962 = vadd.f32 %v802, %v961
      %v963 = vpop.f32.mrf.mxu0
      %964 = vmatprep.mubr.f32.mxu0 0.0
      %965 = vmatmul.mubr.f32.gmra.mxu0 %v832
      %v966 = vpop.f32.mrf.mxu0
      %v967 = vadd.f32 %v802, %v966
      %v968 = vpop.f32.mrf.mxu0
      %969 = vmatprep.mubr.f32.mxu0 0.0
      %970 = vmatmul.mubr.f32.gmra.mxu0 %v835
      %v971 = vpop.f32.mrf.mxu0
      %v972 = vadd.f32 %v802, %v971
      %v973 = vpop.f32.mrf.mxu0
      %974 = vmatprep.mubr.f32.mxu0 0.0
      %975 = vmatmul.mubr.f32.gmra.mxu0 %v838
      %v976 = vpop.f32.mrf.mxu0
      %v977 = vadd.f32 %v802, %v976
      %v978 = vpop.f32.mrf.mxu0
      %979 = vmatprep.mubr.f32.mxu0 0.0
      %980 = vmatmul.mubr.f32.gmra.mxu0 %v841
      %v981 = vpop.f32.mrf.mxu0
      %v982 = vadd.f32 %v802, %v981
      %v983 = vpop.f32.mrf.mxu0
      %984 = vmatprep.mubr.f32.mxu0 0.0
      %985 = vmatmul.mubr.f32.gmra.mxu0 %v844
      %v986 = vpop.f32.mrf.mxu0
      %v987 = vadd.f32 %v802, %v986
      %v988 = vpop.f32.mrf.mxu0
      %989 = vmatprep.mubr.f32.mxu0 0.0
      %990 = vmatmul.mubr.f32.gmra.mxu0 %v847
      %v991 = vpop.f32.mrf.mxu0
      %v992 = vadd.f32 %v802, %v991
      %v993 = vpop.f32.mrf.mxu0
      %994 = vmatprep.mubr.f32.mxu0 0.0
      %995 = vmatmul.mubr.f32.gmra.mxu0 %v850
      %v996 = vpop.f32.mrf.mxu0
      %v997 = vadd.f32 %v802, %v996
      %v998 = vpop.f32.mrf.mxu0
      %999 = vdwg.mxu0
      %vm1000 = vcmask 64512
      %1001 = vst.msk [vmem:[%s280] sm:$0xff] %vm1000, %v922
      %1002 = vst.msk [vmem:[%s280 + $0x8] sm:$0xff] %vm1000, %v927
      %1003 = vst.msk [vmem:[%s280 + $0x10] sm:$0xff] %vm1000, %v932
      %1004 = vst.msk [vmem:[%s280 + $0x18] sm:$0xff] %vm1000, %v937
      %1005 = vst.msk [vmem:[%s280 + $0x20] sm:$0xff] %vm1000, %v942
      %1006 = vst.msk [vmem:[%s280 + $0x28] sm:$0xff] %vm1000, %v947
      %1007 = vst.msk [vmem:[%s280 + $0x30] sm:$0xff] %vm1000, %v952
      %1008 = vst.msk [vmem:[%s280 + $0x38] sm:$0xff] %vm1000, %v957
      %1009 = vst.msk [vmem:[%s280 + $0x40] sm:$0xff] %vm1000, %v962
      %1010 = vst.msk [vmem:[%s280 + $0x48] sm:$0xff] %vm1000, %v967
      %1011 = vst.msk [vmem:[%s280 + $0x50] sm:$0xff] %vm1000, %v972
      %1012 = vst.msk [vmem:[%s280 + $0x58] sm:$0xff] %vm1000, %v977
      %1013 = vst.msk [vmem:[%s280 + $0x60] sm:$0xff] %vm1000, %v982
      %1014 = vst.msk [vmem:[%s280 + $0x68] sm:$0xff] %vm1000, %v987
      %1015 = vst.msk [vmem:[%s280 + $0x70] sm:$0xff] %vm1000, %v992
      %1016 = vst.msk [vmem:[%s280 + $0x78] sm:$0xff] %vm1000, %v997
      %s1017 = smul.u32 16, %s18
      %p1018 = scmp.lt.s32.totalorder %s1017, 31
      %s1019 = scalar_select %p1018, %s1017, 31
      %s1020 = smul.addr %s1019, 8
      %s1021 = scalar_lea.vmem %s7, %s1020
      // Predicated region
      $region49: #{tpu_custom_call.1} parent=47 // pred_check
        %p1022 = pneg %p188
      $region50: #{tpu_custom_call.1} parent=47 // pred_check_branch
        %1024 = sbr.rel (%p1022) target = $region52
      $region51: #{tpu_custom_call.1} parent=47 // pred_region
        %s1025 = smul.u32 16, %s18
      $region52: #{tpu_custom_call.1} parent=47 // pred_fallthru
        _
    $region48: #{tpu_custom_call.1} parent=5 // pred_fallthru
      _
    %p1026 = scmp.le.s32.totalorder 2, %s13
    // Predicated region
    $region53: #{tpu_custom_call.1} parent=5 // pred_check
      %p1027 = pneg %p1026
    $region54: #{tpu_custom_call.1} parent=5 // pred_check_branch
      %1029 = sbr.rel (%p1027) target = $region56
    $region55: #{tpu_custom_call.1} parent=5 // pred_region
      %s1030 = ssub.s32 %s13, 2
      // Predicated region
      $region57: #{tpu_custom_call.1} parent=55 // pred_check
        %p1031 = pneg %p194
      $region58: #{tpu_custom_call.1} parent=55 // pred_check_branch
        %1033 = sbr.rel (%p1031) target = $region60
      $region59: #{tpu_custom_call.1} parent=55 // pred_region
        %s1034 = smul.u32 16, %s19
        %p1035 = scmp.lt.s32.totalorder %s1034, 31
        %s1036 = scalar_select %p1035, %s1034, 31
        %s1037 = smul.addr %s1036, 8
        %s1038 = scalar_lea.vmem %s7, %s1037
      $region60: #{tpu_custom_call.1} parent=55 // pred_fallthru
        _
    $region56: #{tpu_custom_call.1} parent=5 // pred_fallthru
      _
  $region6: #{tpu_custom_call.1} parent=0 // loop_footer
    %s17 = sadd.s32 1, %s13
  $region7: #{tpu_custom_call.1} parent=0 // loop_footer_branch
    %12 = sbr.rel target = $region3
  $region8: #{tpu_custom_call.1} parent=0 // loop_exit
    _

</llo_original>
